<compile_context>
chip_gen: v5e
topology: v5e:2x2
jax: 0.10.0
libtpu: 0.0.40
codegen_flags: <defaults>
</compile_context>

<pallas_src>
import math
from functools import partial

import jax
import jax.numpy as jnp
from jax import lax
from jax.experimental import pallas as pl
from jax.experimental.pallas import tpu as pltpu

EPS = 1e-5
LANE = 128   # pad feature dims to full lane width
SUBL = 8     # pad tiny row dims (graphs / batch) to the 8-sublane granularity


def _vmem_specs(n):
    return [pl.BlockSpec(memory_space=pltpu.MemorySpace.VMEM) for _ in range(n)]


def _pad_to(a, shape, dtype=None):
    """Zero-pad `a` into `shape` (and optionally cast)."""
    out = jnp.zeros(shape, a.dtype if dtype is None else dtype)
    return out.at[tuple(slice(0, s) for s in a.shape)].set(a.astype(out.dtype))


# ----------------------------- Pallas kernels -------------------------------

def graph_encoder_kernel(adj_ref, x_ref,
                         w1_ref, b1_ref, al1_ref, ga1_ref, be1_ref,
                         w2_ref, b2_ref, al2_ref, ga2_ref, be2_ref,
                         w3_ref, b3_ref,
                         p_ref, pt_ref, invc_ref,
                         hw1_ref, hb1_ref, hw2_ref, hb2_ref,
                         o_ref):
    """Fused: GCNx3 (+GraphNorm+ReLU after layers 1,2) -> mean pool -> Linear/ReLU/Linear.

    MXU weight matmuls use bf16 operands (f32 accumulation); GraphNorm statistics
    (membership matmuls) stay in f32 for accuracy. Padded feature lanes are exactly 0.
    """
    adj = adj_ref[...]                     # (N, N)   bf16  D^-1/2 (A+I) D^-1/2
    p = p_ref[...]                         # (N, Gp)  f32   one-hot membership
    pt = pt_ref[...]                       # (Gp, N)  f32   membership^T (precomputed)
    invc = invc_ref[...]                   # (Gp, 1)  f32   1 / nodes-per-graph

    def gcn(h_bf16, w_ref, b_ref):
        xw = jnp.dot(h_bf16, w_ref[...], preferred_element_type=jnp.float32)
        agg = jnp.dot(adj, xw.astype(jnp.bfloat16), preferred_element_type=jnp.float32)
        return agg + b_ref[...]

    def graphnorm_relu(h, alpha, gamma, beta):
        # PyG GraphNorm: gamma * (h - alpha*mean) * rsqrt(var + eps) + beta  (per graph)
        mean_g = jnp.dot(pt, h, preferred_element_type=jnp.float32) * invc     # (Gp, F)
        mean_n = jnp.dot(p, mean_g, preferred_element_type=jnp.float32)        # (N, F)
        hc = h - alpha * mean_n
        var_g = jnp.dot(pt, hc * hc, preferred_element_type=jnp.float32) * invc
        var_n = jnp.dot(p, var_g, preferred_element_type=jnp.float32)
        out = gamma * hc * lax.rsqrt(var_n + EPS) + beta
        return jnp.maximum(out, 0.0)

    h = gcn(x_ref[...], w1_ref, b1_ref)
    h = graphnorm_relu(h, al1_ref[...], ga1_ref[...], be1_ref[...])
    h = gcn(h.astype(jnp.bfloat16), w2_ref, b2_ref)
    h = graphnorm_relu(h, al2_ref[...], ga2_ref[...], be2_ref[...])
    h = gcn(h.astype(jnp.bfloat16), w3_ref, b3_ref)          # last conv: no norm / act

    pooled = jnp.dot(pt, h, preferred_element_type=jnp.float32) * invc         # (Gp, H)
    hid = jnp.dot(pooled.astype(jnp.bfloat16), hw1_ref[...],
                  preferred_element_type=jnp.float32) + hb1_ref[...]
    hid = jnp.maximum(hid, 0.0)
    o_ref[...] = jnp.dot(hid.astype(jnp.bfloat16), hw2_ref[...],
                         preferred_element_type=jnp.float32) + hb2_ref[...]


def text_encoder_kernel(ids_ref, mask_ref, emb_ref, pos_ref,
                        wq_ref, wk_ref, wv_ref, wo_ref,
                        fw1_ref, fb1_ref, fw2_ref, fb2_ref,
                        g1_ref, be1_ref, g2_ref, be2_ref,
                        cls_ref, *, d_model):
    """Fused text block: in-kernel embedding (one-hot matmul) + single transformer
    encoder layer, computing only the CLS (position 0) row after the K/V projections."""
    ids = ids_ref[...]                      # (Bp, S) int32
    mask = mask_ref[...]                    # (Bp, S) f32   1 = keep, 0 = pad
    bp, s = ids.shape
    vp = emb_ref.shape[0]

    # Embedding lookup as one-hot @ table (keeps the gather on the MXU, in VMEM).
    onehot = jnp.where(
        ids[:, :, None] == lax.broadcasted_iota(jnp.int32, (bp, s, vp), 2),
        jnp.float32(1.0), jnp.float32(0.0)).astype(jnp.bfloat16)
    e = jnp.einsum('bsv,vd->bsd', onehot, emb_ref[...],
                   preferred_element_type=jnp.float32)
    e = e + pos_ref[...][None, :, :]                       # (Bp, S, Dp) f32
    eb = e.astype(jnp.bfloat16)

    # Full K / V projections; Q only for the CLS position.
    k = jnp.einsum('bsd,de->bse', eb, wk_ref[...], preferred_element_type=jnp.float32)
    v = jnp.einsum('bsd,de->bse', eb, wv_ref[...], preferred_element_type=jnp.float32)

    e_cls = e[:, 0, :]                                      # (Bp, Dp)
    q = jnp.dot(e_cls.astype(jnp.bfloat16), wq_ref[...],
                preferred_element_type=jnp.float32)

    inv_sqrt_d = 1.0 / math.sqrt(d_model)
    scores = jnp.sum(q[:, None, :] * k, axis=-1) * inv_sqrt_d      # (Bp, S)
    scores = scores + (mask - 1.0) * 1e9
    m = jnp.max(scores, axis=-1, keepdims=True)
    pexp = jnp.exp(scores - m)
    attn = pexp * pl.reciprocal(jnp.sum(pexp, axis=-1, keepdims=True), approx=True)

    ctx = jnp.sum(attn[:, :, None] * v, axis=1)                    # (Bp, Dp)
    ctx = jnp.dot(ctx.astype(jnp.bfloat16), wo_ref[...],
                  preferred_element_type=jnp.float32)

    inv_d = 1.0 / d_model

    def layernorm(h, g, b):
        # Padded lanes of h are exactly 0, so E[x] and E[x^2] over the true d_model
        # lanes are plain lane-sums scaled by 1/d_model.
        mu = jnp.sum(h, axis=-1, keepdims=True) * inv_d
        ex2 = jnp.sum(h * h, axis=-1, keepdims=True) * inv_d
        var = ex2 - mu * mu
        return g * (h - mu) * lax.rsqrt(var + EPS) + b

    h = layernorm(e_cls + ctx, g1_ref[...], be1_ref[...])

    f = jnp.dot(h.astype(jnp.bfloat16), fw1_ref[...],
                preferred_element_type=jnp.float32) + fb1_ref[...]
    f = jnp.maximum(f, 0.0)
    f = jnp.dot(f.astype(jnp.bfloat16), fw2_ref[...],
                preferred_element_type=jnp.float32) + fb2_ref[...]

    cls_ref[...] = layernorm(h + f, g2_ref[...], be2_ref[...])


# ----------------------------- wrappers (glue) -------------------------------

def _pad_w(w):                    # weights -> (128, 128) bf16, zero-padded
    return _pad_to(w, (LANE, LANE), jnp.bfloat16)


def _pad_v(v):                    # 1-D params -> (1, 128) f32, zero-padded
    return _pad_to(v.reshape(1, -1), (1, LANE), jnp.float32)


def prepare_graph_operands(gp, x, adj_norm, batch, n_graphs):
    assert len(gp['gcn_w']) == 3, "fused graph kernel assumes gnn_num_layers == 3"
    n = x.shape[0]
    gp_rows = ((n_graphs + SUBL - 1) // SUBL) * SUBL
    p = jax.nn.one_hot(batch, n_graphs, dtype=jnp.float32)          # (N, G)
    p_pad = _pad_to(p, (n, gp_rows))                                # (N, Gp)
    pt_pad = p_pad.T                                                # (Gp, N) — wrapper-side
    counts = jnp.maximum(jnp.sum(p_pad, axis=0), 1.0)               # avoid 1/0 on pad rows
    invc = (1.0 / counts)[:, None]                                  # (Gp, 1)

    ops = (adj_norm.astype(jnp.bfloat16),
           _pad_to(x, (n, LANE), jnp.bfloat16),
           _pad_w(gp['gcn_w'][0]), _pad_v(gp['gcn_b'][0]),
           _pad_v(gp['norm_alpha'][0]), _pad_v(gp['norm_gamma'][0]), _pad_v(gp['norm_beta'][0]),
           _pad_w(gp['gcn_w'][1]), _pad_v(gp['gcn_b'][1]),
           _pad_v(gp['norm_alpha'][1]), _pad_v(gp['norm_gamma'][1]), _pad_v(gp['norm_beta'][1]),
           _pad_w(gp['gcn_w'][2]), _pad_v(gp['gcn_b'][2]),
           p_pad, pt_pad, invc,
           _pad_w(gp['head_w1']), _pad_v(gp['head_b1']),
           _pad_w(gp['head_w2']), _pad_v(gp['head_b2']))
    return ops, gp_rows


def prepare_text_operands(tp, input_ids, attention_mask):
    b, s = input_ids.shape
    bp_rows = ((b + SUBL - 1) // SUBL) * SUBL
    vp = ((tp['embed'].shape[0] + LANE - 1) // LANE) * LANE
    ids_pad = _pad_to(input_ids.astype(jnp.int32), (bp_rows, s), jnp.int32)
    mask_pad = jnp.ones((bp_rows, s), jnp.float32).at[:b, :].set(
        attention_mask.astype(jnp.float32))

    ops = (ids_pad, mask_pad,
           _pad_to(tp['embed'], (vp, LANE), jnp.bfloat16),
           _pad_to(tp['pos'], (s, LANE), jnp.float32),
           _pad_w(tp['wq']), _pad_w(tp['wk']), _pad_w(tp['wv']), _pad_w(tp['wo']),
           _pad_w(tp['ff_w1']), _pad_v(tp['ff_b1']),
           _pad_w(tp['ff_w2']), _pad_v(tp['ff_b2']),
           _pad_v(tp['ln1_g']), _pad_v(tp['ln1_b']),
           _pad_v(tp['ln2_g']), _pad_v(tp['ln2_b']))
    return ops, bp_rows


def graph_encoder_forward(graph_ops, gp_rows, n_graphs, nout):
    out = pl.pallas_call(
        graph_encoder_kernel,
        out_shape=jax.ShapeDtypeStruct((gp_rows, LANE), jnp.float32),
        in_specs=_vmem_specs(len(graph_ops)),
        out_specs=pl.BlockSpec(memory_space=pltpu.MemorySpace.VMEM),
        compiler_params=pltpu.CompilerParams(vmem_limit_bytes=8 * 1024 * 1024),
    )(*graph_ops)
    return out[:n_graphs, :nout]


def text_encoder_forward(text_ops, bp_rows, batch, d_model):
    out = pl.pallas_call(
        partial(text_encoder_kernel, d_model=d_model),
        out_shape=jax.ShapeDtypeStruct((bp_rows, LANE), jnp.float32),
        in_specs=_vmem_specs(len(text_ops)),
        out_specs=pl.BlockSpec(memory_space=pltpu.MemorySpace.VMEM),
        compiler_params=pltpu.CompilerParams(vmem_limit_bytes=8 * 1024 * 1024),
    )(*text_ops)
    return out[:batch, :d_model]


def model_forward(gparams, tparams, graph_x, adj_norm, batch, n_graphs,
                  input_ids, attention_mask, nout, d_model):
    graph_ops, gp_rows = prepare_graph_operands(gparams, graph_x, adj_norm, batch, n_graphs)
    text_ops, bp_rows = prepare_text_operands(tparams, input_ids, attention_mask)
    graph_encoded = graph_encoder_forward(graph_ops, gp_rows, n_graphs, nout)
    text_encoded = text_encoder_forward(text_ops, bp_rows, input_ids.shape[0], d_model)
    return graph_encoded, text_encoded


# ----------------------------- parameter init -------------------------------

def init_params(key, num_node_features, hidden, nhid, nout, num_layers,
                vocab, seq_len, d_model, d_ff):
    keys = iter(jax.random.split(key, 32))

    def lin(k, fan_in, fan_out):
        s = 1.0 / math.sqrt(fan_in)
        return jax.random.uniform(k, (fan_in, fan_out), jnp.float32, -s, s)

    dims = [num_node_features] + [hidden] * num_layers
    gparams = dict(
        gcn_w=[lin(next(keys), dims[i], dims[i + 1]) for i in range(num_layers)],
        gcn_b=[jnp.zeros((dims[i + 1],), jnp.float32) for i in range(num_layers)],
        norm_alpha=[jnp.ones((hidden,), jnp.float32) for _ in range(num_layers - 1)],
        norm_gamma=[jnp.ones((hidden,), jnp.float32) for _ in range(num_layers - 1)],
        norm_beta=[jnp.zeros((hidden,), jnp.float32) for _ in range(num_layers - 1)],
        head_w1=lin(next(keys), hidden, nhid),
        head_b1=jnp.zeros((nhid,), jnp.float32),
        head_w2=lin(next(keys), nhid, nout),
        head_b2=jnp.zeros((nout,), jnp.float32),
    )

    tparams = dict(
        embed=jax.random.normal(next(keys), (vocab, d_model), jnp.float32) * 0.02,
        pos=jax.random.normal(next(keys), (seq_len, d_model), jnp.float32) * 0.02,
        wq=lin(next(keys), d_model, d_model),
        wk=lin(next(keys), d_model, d_model),
        wv=lin(next(keys), d_model, d_model),
        wo=lin(next(keys), d_model, d_model),
        ff_w1=lin(next(keys), d_model, d_ff),
        ff_b1=jnp.zeros((d_ff,), jnp.float32),
        ff_w2=lin(next(keys), d_ff, d_model),
        ff_b2=jnp.zeros((d_model,), jnp.float32),
        ln1_g=jnp.ones((d_model,), jnp.float32),
        ln1_b=jnp.zeros((d_model,), jnp.float32),
        ln2_g=jnp.ones((d_model,), jnp.float32),
        ln2_b=jnp.zeros((d_model,), jnp.float32),
    )
    return gparams, tparams


# ----------------------------- main -------------------------------

if __name__ == "__main__":
    key = jax.random.PRNGKey(0)

    NUM_NODE_FEATURES = 8
    GRAPH_HIDDEN = 32
    NHID = 32
    NOUT = 16
    GNN_NUM_LAYERS = 3
    N_NODES_PER_GRAPH = 8
    N_GRAPHS = 2
    N = N_NODES_PER_GRAPH * N_GRAPHS
    VOCAB, SEQ, D_MODEL, D_FF = 64, 8, 32, 64

    k_param, k_x, k_ids = jax.random.split(key, 3)
    gparams, tparams = init_params(k_param, NUM_NODE_FEATURES, GRAPH_HIDDEN, NHID,
                                   NOUT, GNN_NUM_LAYERS, VOCAB, SEQ, D_MODEL, D_FF)

    # --- graph batch (2 ring graphs of 8 nodes each) ---
    graph_x = jax.random.normal(k_x, (N, NUM_NODE_FEATURES), jnp.float32)
    batch = jnp.repeat(jnp.arange(N_GRAPHS), N_NODES_PER_GRAPH)              # (N,)
    src, dst = [], []
    for g in range(N_GRAPHS):
        base = g * N_NODES_PER_GRAPH
        for i in range(N_NODES_PER_GRAPH):
            j = (i + 1) % N_NODES_PER_GRAPH
            src += [base + i, base + j]
            dst += [base + j, base + i]
    edge_index = jnp.array([src, dst], jnp.int32)                            # (2, E)

    # Dense normalized adjacency  D^{-1/2} (A + I) D^{-1/2}   (glue, not hot path)
    A = jnp.zeros((N, N), jnp.float32).at[edge_index[0], edge_index[1]].set(1.0)
    A = A + jnp.eye(N, dtype=jnp.float32)
    deg = jnp.sum(A, axis=1)
    dinv = 1.0 / jnp.sqrt(deg)
    adj_norm = dinv[:, None] * A * dinv[None, :]

    # --- text batch ---
    input_ids = jax.random.randint(k_ids, (N_GRAPHS, SEQ), 0, VOCAB)
    attention_mask = jnp.ones((N_GRAPHS, SEQ), jnp.float32)

    graph_encoded, text_encoded = model_forward(
        gparams, tparams, graph_x, adj_norm, batch, N_GRAPHS,
        input_ids, attention_mask, NOUT, D_MODEL)

    jax.block_until_ready((graph_encoded, text_encoded))
    assert graph_encoded.shape == (N_GRAPHS, NOUT)
    assert text_encoded.shape == (N_GRAPHS, D_MODEL)
    assert bool(jnp.all(jnp.isfinite(graph_encoded)))
    assert bool(jnp.all(jnp.isfinite(text_encoded)))
    print("KERNEL_OK")
</pallas_src>

<mosaic_0001>
module attributes {stable_mosaic.version = 11 : i64} {
  func.func @graph_encoder_kernel(%arg0: memref<16x16xbf16, #tpu.memory_space<vmem>>, %arg1: memref<16x128xbf16, #tpu.memory_space<vmem>>, %arg2: memref<128x128xbf16, #tpu.memory_space<vmem>>, %arg3: memref<1x128xf32, #tpu.memory_space<vmem>>, %arg4: memref<1x128xf32, #tpu.memory_space<vmem>>, %arg5: memref<1x128xf32, #tpu.memory_space<vmem>>, %arg6: memref<1x128xf32, #tpu.memory_space<vmem>>, %arg7: memref<128x128xbf16, #tpu.memory_space<vmem>>, %arg8: memref<1x128xf32, #tpu.memory_space<vmem>>, %arg9: memref<1x128xf32, #tpu.memory_space<vmem>>, %arg10: memref<1x128xf32, #tpu.memory_space<vmem>>, %arg11: memref<1x128xf32, #tpu.memory_space<vmem>>, %arg12: memref<128x128xbf16, #tpu.memory_space<vmem>>, %arg13: memref<1x128xf32, #tpu.memory_space<vmem>>, %arg14: memref<16x8xf32, #tpu.memory_space<vmem>>, %arg15: memref<8x16xf32, #tpu.memory_space<vmem>>, %arg16: memref<8x1xf32, #tpu.memory_space<vmem>>, %arg17: memref<128x128xbf16, #tpu.memory_space<vmem>>, %arg18: memref<1x128xf32, #tpu.memory_space<vmem>>, %arg19: memref<128x128xbf16, #tpu.memory_space<vmem>>, %arg20: memref<1x128xf32, #tpu.memory_space<vmem>>, %arg21: memref<8x128xf32, #tpu.memory_space<vmem>>) attributes {dimension_semantics = [], scalar_prefetch = 0 : i64, scratch_operands = 0 : i64, tpu.core_type = #tpu.core_type<tc>} {
    %c0 = arith.constant 0 : index
    %c0_0 = arith.constant 0 : index
    %0 = vector.load %arg0[%c0, %c0_0] : memref<16x16xbf16, #tpu.memory_space<vmem>>, vector<16x16xbf16>
    %c0_1 = arith.constant 0 : index
    %c0_2 = arith.constant 0 : index
    %1 = vector.load %arg14[%c0_1, %c0_2] : memref<16x8xf32, #tpu.memory_space<vmem>>, vector<16x8xf32>
    %c0_3 = arith.constant 0 : index
    %c0_4 = arith.constant 0 : index
    %2 = vector.load %arg15[%c0_3, %c0_4] : memref<8x16xf32, #tpu.memory_space<vmem>>, vector<8x16xf32>
    %c0_5 = arith.constant 0 : index
    %c0_6 = arith.constant 0 : index
    %3 = vector.load %arg16[%c0_5, %c0_6] : memref<8x1xf32, #tpu.memory_space<vmem>>, vector<8x1xf32>
    %c0_7 = arith.constant 0 : index
    %c0_8 = arith.constant 0 : index
    %4 = vector.load %arg1[%c0_7, %c0_8] : memref<16x128xbf16, #tpu.memory_space<vmem>>, vector<16x128xbf16>
    %c0_9 = arith.constant 0 : index
    %c0_10 = arith.constant 0 : index
    %5 = vector.load %arg2[%c0_9, %c0_10] : memref<128x128xbf16, #tpu.memory_space<vmem>>, vector<128x128xbf16>
    %cst = arith.constant dense<0.000000e+00> : vector<16x128xf32>
    %6 = tpu.matmul %4, %5, %cst {dimension_numbers = #tpu.dot_dimension_numbers<[1], [0], [0], [1], [0, 0, 1, 1], [], []>} : vector<16x128xbf16>, vector<128x128xbf16>, vector<16x128xf32> -> vector<16x128xf32>
    %7 = arith.truncf %6 : vector<16x128xf32> to vector<16x128xbf16>
    %cst_11 = arith.constant dense<0.000000e+00> : vector<16x128xf32>
    %8 = tpu.matmul %0, %7, %cst_11 {dimension_numbers = #tpu.dot_dimension_numbers<[1], [0], [0], [1], [0, 0, 1, 1], [], []>} : vector<16x16xbf16>, vector<16x128xbf16>, vector<16x128xf32> -> vector<16x128xf32>
    %c0_12 = arith.constant 0 : index
    %c0_13 = arith.constant 0 : index
    %9 = vector.load %arg3[%c0_12, %c0_13] : memref<1x128xf32, #tpu.memory_space<vmem>>, vector<1x128xf32>
    %10 = vector.broadcast %9 : vector<1x128xf32> to vector<16x128xf32>
    %11 = arith.addf %8, %10 : vector<16x128xf32>
    %c0_14 = arith.constant 0 : index
    %c0_15 = arith.constant 0 : index
    %12 = vector.load %arg4[%c0_14, %c0_15] : memref<1x128xf32, #tpu.memory_space<vmem>>, vector<1x128xf32>
    %c0_16 = arith.constant 0 : index
    %c0_17 = arith.constant 0 : index
    %13 = vector.load %arg5[%c0_16, %c0_17] : memref<1x128xf32, #tpu.memory_space<vmem>>, vector<1x128xf32>
    %c0_18 = arith.constant 0 : index
    %c0_19 = arith.constant 0 : index
    %14 = vector.load %arg6[%c0_18, %c0_19] : memref<1x128xf32, #tpu.memory_space<vmem>>, vector<1x128xf32>
    %cst_20 = arith.constant dense<0.000000e+00> : vector<8x128xf32>
    %15 = tpu.matmul %2, %11, %cst_20 {dimension_numbers = #tpu.dot_dimension_numbers<[1], [0], [0], [1], [0, 0, 1, 1], [], []>} : vector<8x16xf32>, vector<16x128xf32>, vector<8x128xf32> -> vector<8x128xf32>
    %16 = vector.broadcast %3 : vector<8x1xf32> to vector<8x128xf32>
    %17 = arith.mulf %15, %16 : vector<8x128xf32>
    %cst_21 = arith.constant dense<0.000000e+00> : vector<16x128xf32>
    %18 = tpu.matmul %1, %17, %cst_21 {dimension_numbers = #tpu.dot_dimension_numbers<[1], [0], [0], [1], [0, 0, 1, 1], [], []>} : vector<16x8xf32>, vector<8x128xf32>, vector<16x128xf32> -> vector<16x128xf32>
    %19 = vector.broadcast %12 : vector<1x128xf32> to vector<16x128xf32>
    %20 = arith.mulf %19, %18 : vector<16x128xf32>
    %21 = arith.subf %11, %20 : vector<16x128xf32>
    %22 = arith.mulf %21, %21 : vector<16x128xf32>
    %cst_22 = arith.constant dense<0.000000e+00> : vector<8x128xf32>
    %23 = tpu.matmul %2, %22, %cst_22 {dimension_numbers = #tpu.dot_dimension_numbers<[1], [0], [0], [1], [0, 0, 1, 1], [], []>} : vector<8x16xf32>, vector<16x128xf32>, vector<8x128xf32> -> vector<8x128xf32>
    %24 = vector.broadcast %3 : vector<8x1xf32> to vector<8x128xf32>
    %25 = arith.mulf %23, %24 : vector<8x128xf32>
    %cst_23 = arith.constant dense<0.000000e+00> : vector<16x128xf32>
    %26 = tpu.matmul %1, %25, %cst_23 {dimension_numbers = #tpu.dot_dimension_numbers<[1], [0], [0], [1], [0, 0, 1, 1], [], []>} : vector<16x8xf32>, vector<8x128xf32>, vector<16x128xf32> -> vector<16x128xf32>
    %27 = vector.broadcast %13 : vector<1x128xf32> to vector<16x128xf32>
    %28 = arith.mulf %27, %21 : vector<16x128xf32>
    %cst_24 = arith.constant 9.99999974E-6 : f32
    %29 = vector.broadcast %cst_24 : f32 to vector<16x128xf32>
    %30 = arith.addf %26, %29 : vector<16x128xf32>
    %31 = math.rsqrt %30 : vector<16x128xf32>
    %32 = arith.mulf %28, %31 : vector<16x128xf32>
    %33 = vector.broadcast %14 : vector<1x128xf32> to vector<16x128xf32>
    %34 = arith.addf %32, %33 : vector<16x128xf32>
    %cst_25 = arith.constant 0.000000e+00 : f32
    %35 = vector.broadcast %cst_25 : f32 to vector<16x128xf32>
    %36 = arith.maximumf %34, %35 : vector<16x128xf32>
    %37 = arith.truncf %36 : vector<16x128xf32> to vector<16x128xbf16>
    %c0_26 = arith.constant 0 : index
    %c0_27 = arith.constant 0 : index
    %38 = vector.load %arg7[%c0_26, %c0_27] : memref<128x128xbf16, #tpu.memory_space<vmem>>, vector<128x128xbf16>
    %cst_28 = arith.constant dense<0.000000e+00> : vector<16x128xf32>
    %39 = tpu.matmul %37, %38, %cst_28 {dimension_numbers = #tpu.dot_dimension_numbers<[1], [0], [0], [1], [0, 0, 1, 1], [], []>} : vector<16x128xbf16>, vector<128x128xbf16>, vector<16x128xf32> -> vector<16x128xf32>
    %40 = arith.truncf %39 : vector<16x128xf32> to vector<16x128xbf16>
    %cst_29 = arith.constant dense<0.000000e+00> : vector<16x128xf32>
    %41 = tpu.matmul %0, %40, %cst_29 {dimension_numbers = #tpu.dot_dimension_numbers<[1], [0], [0], [1], [0, 0, 1, 1], [], []>} : vector<16x16xbf16>, vector<16x128xbf16>, vector<16x128xf32> -> vector<16x128xf32>
    %c0_30 = arith.constant 0 : index
    %c0_31 = arith.constant 0 : index
    %42 = vector.load %arg8[%c0_30, %c0_31] : memref<1x128xf32, #tpu.memory_space<vmem>>, vector<1x128xf32>
    %43 = vector.broadcast %42 : vector<1x128xf32> to vector<16x128xf32>
    %44 = arith.addf %41, %43 : vector<16x128xf32>
    %c0_32 = arith.constant 0 : index
    %c0_33 = arith.constant 0 : index
    %45 = vector.load %arg9[%c0_32, %c0_33] : memref<1x128xf32, #tpu.memory_space<vmem>>, vector<1x128xf32>
    %c0_34 = arith.constant 0 : index
    %c0_35 = arith.constant 0 : index
    %46 = vector.load %arg10[%c0_34, %c0_35] : memref<1x128xf32, #tpu.memory_space<vmem>>, vector<1x128xf32>
    %c0_36 = arith.constant 0 : index
    %c0_37 = arith.constant 0 : index
    %47 = vector.load %arg11[%c0_36, %c0_37] : memref<1x128xf32, #tpu.memory_space<vmem>>, vector<1x128xf32>
    %cst_38 = arith.constant dense<0.000000e+00> : vector<8x128xf32>
    %48 = tpu.matmul %2, %44, %cst_38 {dimension_numbers = #tpu.dot_dimension_numbers<[1], [0], [0], [1], [0, 0, 1, 1], [], []>} : vector<8x16xf32>, vector<16x128xf32>, vector<8x128xf32> -> vector<8x128xf32>
    %49 = vector.broadcast %3 : vector<8x1xf32> to vector<8x128xf32>
    %50 = arith.mulf %48, %49 : vector<8x128xf32>
    %cst_39 = arith.constant dense<0.000000e+00> : vector<16x128xf32>
    %51 = tpu.matmul %1, %50, %cst_39 {dimension_numbers = #tpu.dot_dimension_numbers<[1], [0], [0], [1], [0, 0, 1, 1], [], []>} : vector<16x8xf32>, vector<8x128xf32>, vector<16x128xf32> -> vector<16x128xf32>
    %52 = vector.broadcast %45 : vector<1x128xf32> to vector<16x128xf32>
    %53 = arith.mulf %52, %51 : vector<16x128xf32>
    %54 = arith.subf %44, %53 : vector<16x128xf32>
    %55 = arith.mulf %54, %54 : vector<16x128xf32>
    %cst_40 = arith.constant dense<0.000000e+00> : vector<8x128xf32>
    %56 = tpu.matmul %2, %55, %cst_40 {dimension_numbers = #tpu.dot_dimension_numbers<[1], [0], [0], [1], [0, 0, 1, 1], [], []>} : vector<8x16xf32>, vector<16x128xf32>, vector<8x128xf32> -> vector<8x128xf32>
    %57 = vector.broadcast %3 : vector<8x1xf32> to vector<8x128xf32>
    %58 = arith.mulf %56, %57 : vector<8x128xf32>
    %cst_41 = arith.constant dense<0.000000e+00> : vector<16x128xf32>
    %59 = tpu.matmul %1, %58, %cst_41 {dimension_numbers = #tpu.dot_dimension_numbers<[1], [0], [0], [1], [0, 0, 1, 1], [], []>} : vector<16x8xf32>, vector<8x128xf32>, vector<16x128xf32> -> vector<16x128xf32>
    %60 = vector.broadcast %46 : vector<1x128xf32> to vector<16x128xf32>
    %61 = arith.mulf %60, %54 : vector<16x128xf32>
    %cst_42 = arith.constant 9.99999974E-6 : f32
    %62 = vector.broadcast %cst_42 : f32 to vector<16x128xf32>
    %63 = arith.addf %59, %62 : vector<16x128xf32>
    %64 = math.rsqrt %63 : vector<16x128xf32>
    %65 = arith.mulf %61, %64 : vector<16x128xf32>
    %66 = vector.broadcast %47 : vector<1x128xf32> to vector<16x128xf32>
    %67 = arith.addf %65, %66 : vector<16x128xf32>
    %cst_43 = arith.constant 0.000000e+00 : f32
    %68 = vector.broadcast %cst_43 : f32 to vector<16x128xf32>
    %69 = arith.maximumf %67, %68 : vector<16x128xf32>
    %70 = arith.truncf %69 : vector<16x128xf32> to vector<16x128xbf16>
    %c0_44 = arith.constant 0 : index
    %c0_45 = arith.constant 0 : index
    %71 = vector.load %arg12[%c0_44, %c0_45] : memref<128x128xbf16, #tpu.memory_space<vmem>>, vector<128x128xbf16>
    %cst_46 = arith.constant dense<0.000000e+00> : vector<16x128xf32>
    %72 = tpu.matmul %70, %71, %cst_46 {dimension_numbers = #tpu.dot_dimension_numbers<[1], [0], [0], [1], [0, 0, 1, 1], [], []>} : vector<16x128xbf16>, vector<128x128xbf16>, vector<16x128xf32> -> vector<16x128xf32>
    %73 = arith.truncf %72 : vector<16x128xf32> to vector<16x128xbf16>
    %cst_47 = arith.constant dense<0.000000e+00> : vector<16x128xf32>
    %74 = tpu.matmul %0, %73, %cst_47 {dimension_numbers = #tpu.dot_dimension_numbers<[1], [0], [0], [1], [0, 0, 1, 1], [], []>} : vector<16x16xbf16>, vector<16x128xbf16>, vector<16x128xf32> -> vector<16x128xf32>
    %c0_48 = arith.constant 0 : index
    %c0_49 = arith.constant 0 : index
    %75 = vector.load %arg13[%c0_48, %c0_49] : memref<1x128xf32, #tpu.memory_space<vmem>>, vector<1x128xf32>
    %76 = vector.broadcast %75 : vector<1x128xf32> to vector<16x128xf32>
    %77 = arith.addf %74, %76 : vector<16x128xf32>
    %cst_50 = arith.constant dense<0.000000e+00> : vector<8x128xf32>
    %78 = tpu.matmul %2, %77, %cst_50 {dimension_numbers = #tpu.dot_dimension_numbers<[1], [0], [0], [1], [0, 0, 1, 1], [], []>} : vector<8x16xf32>, vector<16x128xf32>, vector<8x128xf32> -> vector<8x128xf32>
    %79 = vector.broadcast %3 : vector<8x1xf32> to vector<8x128xf32>
    %80 = arith.mulf %78, %79 : vector<8x128xf32>
    %81 = arith.truncf %80 : vector<8x128xf32> to vector<8x128xbf16>
    %c0_51 = arith.constant 0 : index
    %c0_52 = arith.constant 0 : index
    %82 = vector.load %arg17[%c0_51, %c0_52] : memref<128x128xbf16, #tpu.memory_space<vmem>>, vector<128x128xbf16>
    %cst_53 = arith.constant dense<0.000000e+00> : vector<8x128xf32>
    %83 = tpu.matmul %81, %82, %cst_53 {dimension_numbers = #tpu.dot_dimension_numbers<[1], [0], [0], [1], [0, 0, 1, 1], [], []>} : vector<8x128xbf16>, vector<128x128xbf16>, vector<8x128xf32> -> vector<8x128xf32>
    %c0_54 = arith.constant 0 : index
    %c0_55 = arith.constant 0 : index
    %84 = vector.load %arg18[%c0_54, %c0_55] : memref<1x128xf32, #tpu.memory_space<vmem>>, vector<1x128xf32>
    %85 = vector.broadcast %84 : vector<1x128xf32> to vector<8x128xf32>
    %86 = arith.addf %83, %85 : vector<8x128xf32>
    %cst_56 = arith.constant 0.000000e+00 : f32
    %87 = vector.broadcast %cst_56 : f32 to vector<8x128xf32>
    %88 = arith.maximumf %86, %87 : vector<8x128xf32>
    %89 = arith.truncf %88 : vector<8x128xf32> to vector<8x128xbf16>
    %c0_57 = arith.constant 0 : index
    %c0_58 = arith.constant 0 : index
    %90 = vector.load %arg19[%c0_57, %c0_58] : memref<128x128xbf16, #tpu.memory_space<vmem>>, vector<128x128xbf16>
    %cst_59 = arith.constant dense<0.000000e+00> : vector<8x128xf32>
    %91 = tpu.matmul %89, %90, %cst_59 {dimension_numbers = #tpu.dot_dimension_numbers<[1], [0], [0], [1], [0, 0, 1, 1], [], []>} : vector<8x128xbf16>, vector<128x128xbf16>, vector<8x128xf32> -> vector<8x128xf32>
    %c0_60 = arith.constant 0 : index
    %c0_61 = arith.constant 0 : index
    %92 = vector.load %arg20[%c0_60, %c0_61] : memref<1x128xf32, #tpu.memory_space<vmem>>, vector<1x128xf32>
    %93 = vector.broadcast %92 : vector<1x128xf32> to vector<8x128xf32>
    %94 = arith.addf %91, %93 : vector<8x128xf32>
    %c0_62 = arith.constant 0 : index
    %c0_63 = arith.constant 0 : index
    %95 = vector.load %arg21[%c0_62, %c0_63] : memref<8x128xf32, #tpu.memory_space<vmem>>, vector<8x128xf32>
    tpu.vector_store %arg21[%c0_62, %c0_63], %94 {strides = array<i32>} : memref<8x128xf32, #tpu.memory_space<vmem>>, vector<8x128xf32>,
    return
  }
}

</mosaic_0001>

<llo_original>
// kernel: tpu_custom_call.1
$region0: #{tpu_custom_call.1}
  #allocation0 [shape = 'u32[]', space=smem, size = 0x4, offset = 0x4, fixed_abs, tag = 'smem constant byte address 0x4 - core index']
  #allocation1 [shape = 'u32[72,128]{1,0:T(1,128)}', space=vmem, size = 0x9000, scoped, tag = 'internal scratch']
  %s0 = inlined_call_operand.vmem [shape: bf16[16,16], index: 0, kind: input, shape index: {}]
  %s1 = inlined_call_operand.vmem [shape: bf16[16,128], index: 1, kind: input, shape index: {}]
  %s2 = inlined_call_operand.hbm [shape: bf16[128,128], index: 2, kind: input, shape index: {}]
  %s3 = inlined_call_operand.vmem [shape: f32[1,128], index: 3, kind: input, shape index: {}]
  %s4 = inlined_call_operand.vmem [shape: f32[1,128], index: 4, kind: input, shape index: {}]
  %s5 = inlined_call_operand.vmem [shape: f32[1,128], index: 5, kind: input, shape index: {}]
  %s6 = inlined_call_operand.vmem [shape: f32[1,128], index: 6, kind: input, shape index: {}]
  %s7 = inlined_call_operand.hbm [shape: bf16[128,128], index: 7, kind: input, shape index: {}]
  %s8 = inlined_call_operand.vmem [shape: f32[1,128], index: 8, kind: input, shape index: {}]
  %s9 = inlined_call_operand.vmem [shape: f32[1,128], index: 9, kind: input, shape index: {}]
  %s10 = inlined_call_operand.vmem [shape: f32[1,128], index: 10, kind: input, shape index: {}]
  %s11 = inlined_call_operand.vmem [shape: f32[1,128], index: 11, kind: input, shape index: {}]
  %s12 = inlined_call_operand.hbm [shape: bf16[128,128], index: 12, kind: input, shape index: {}]
  %s13 = inlined_call_operand.vmem [shape: f32[1,128], index: 13, kind: input, shape index: {}]
  %s14 = inlined_call_operand.vmem [shape: f32[16,8], index: 14, kind: input, shape index: {}]
  %s15 = inlined_call_operand.vmem [shape: f32[8,16], index: 15, kind: input, shape index: {}]
  %s16 = inlined_call_operand.vmem [shape: f32[8,1], index: 16, kind: input, shape index: {}]
  %s17 = inlined_call_operand.hbm [shape: bf16[128,128], index: 17, kind: input, shape index: {}]
  %s18 = inlined_call_operand.vmem [shape: f32[1,128], index: 18, kind: input, shape index: {}]
  %s19 = inlined_call_operand.hbm [shape: bf16[128,128], index: 19, kind: input, shape index: {}]
  %s20 = inlined_call_operand.vmem [shape: f32[1,128], index: 20, kind: input, shape index: {}]
  %s21 = inlined_call_operand.hbm [shape: f32[8,128], index: 21, kind: output, shape index: {}]
  %s22 = sld [smem:[#allocation0]]
  $region114: #{tpu_custom_call.1} parent=0
    _
  %s24 = ssub.s32 1, %s22
  %s25 = scalar_select 0, %s24, %s22
  $region1: #{tpu_custom_call.1} parent=0
    #allocation2 [shape = 'u8[32768]{0}', space=vmem, size = 0x8000, scoped, tag = 'input window, operand 2, single buffered']
    #allocation3 [shape = 's32[1]{0}', space=sflag, size = 0x4, scoped, tag = 'scoped memory for tpu_custom_call.1']
    #allocation4 [shape = 's32[1]{0}', space=sflag, size = 0x4, scoped, tag = 'scoped memory for tpu_custom_call.1']
    #allocation5 [shape = 'u8[32768]{0}', space=vmem, size = 0x8000, scoped, tag = 'input window, operand 7, single buffered']
    #allocation6 [shape = 's32[1]{0}', space=sflag, size = 0x4, scoped, tag = 'scoped memory for tpu_custom_call.1']
    #allocation7 [shape = 'u8[32768]{0}', space=vmem, size = 0x8000, scoped, tag = 'input window, operand 12, single buffered']
    #allocation8 [shape = 'u8[32768]{0}', space=vmem, size = 0x8000, scoped, tag = 'input window, operand 17, single buffered']
    #allocation9 [shape = 's32[1]{0}', space=sflag, size = 0x4, scoped, tag = 'scoped memory for tpu_custom_call.1']
    #allocation10 [shape = 'u8[32768]{0}', space=vmem, size = 0x8000, scoped, tag = 'input window, operand 19, single buffered']
    #allocation11 [shape = 'u8[4096]{0}', space=vmem, size = 0x1000, scoped, tag = 'output window, operand 0, single buffered']
    %26 = vsyncpa [#allocation3], 0
    %27 = vsyncpa [#allocation6], 0
    %28 = vsyncpa [#allocation9], 0
    %29 = vsyncpa [#allocation4], 0
    // Predicated region
    $region2: #{tpu_custom_call.1} parent=1 // pred_check
      _
    $region3: #{tpu_custom_call.1} parent=1 // pred_check_branch
      %31 = sbr.rel (0) target = $region5
    $region4: #{tpu_custom_call.1} parent=1 // pred_region
      _
    $region5: #{tpu_custom_call.1} parent=1 // pred_fallthru
      _
    // Predicated region
    $region6: #{tpu_custom_call.1} parent=1 // pred_check
      _
    $region7: #{tpu_custom_call.1} parent=1 // pred_check_branch
      %33 = sbr.rel (0) target = $region9
    $region8: #{tpu_custom_call.1} parent=1 // pred_region
      _
    $region9: #{tpu_custom_call.1} parent=1 // pred_fallthru
      _
    // Predicated region
    $region10: #{tpu_custom_call.1} parent=1 // pred_check
      _
    $region11: #{tpu_custom_call.1} parent=1 // pred_check_branch
      %35 = sbr.rel (0) target = $region13
    $region12: #{tpu_custom_call.1} parent=1 // pred_region
      %37 = vsyncadd [#allocation3], 0
      %s38 = sshll.u32 %s2, 4
      %s39 = int_to_ptr.hbm [resolvable:$true] %s38
      %s40 = sshll.u32 [#allocation2], 4
      %s41 = int_to_ptr.vmem [resolvable:$true] %s40
      %46 = dma.hbm_to_vmem [thread:$0]  %s39, 1024, %s41, [#allocation3], 64, 64, 4
    $region13: #{tpu_custom_call.1} parent=1 // pred_fallthru
      _
    // Predicated region
    $region14: #{tpu_custom_call.1} parent=1 // pred_check
      _
    $region15: #{tpu_custom_call.1} parent=1 // pred_check_branch
      %48 = sbr.rel (0) target = $region17
    $region16: #{tpu_custom_call.1} parent=1 // pred_region
      _
    $region17: #{tpu_custom_call.1} parent=1 // pred_fallthru
      _
    // Predicated region
    $region18: #{tpu_custom_call.1} parent=1 // pred_check
      _
    $region19: #{tpu_custom_call.1} parent=1 // pred_check_branch
      %50 = sbr.rel (0) target = $region21
    $region20: #{tpu_custom_call.1} parent=1 // pred_region
      _
    $region21: #{tpu_custom_call.1} parent=1 // pred_fallthru
      _
    // Predicated region
    $region22: #{tpu_custom_call.1} parent=1 // pred_check
      _
    $region23: #{tpu_custom_call.1} parent=1 // pred_check_branch
      %52 = sbr.rel (0) target = $region25
    $region24: #{tpu_custom_call.1} parent=1 // pred_region
      _
    $region25: #{tpu_custom_call.1} parent=1 // pred_fallthru
      _
    // Predicated region
    $region26: #{tpu_custom_call.1} parent=1 // pred_check
      _
    $region27: #{tpu_custom_call.1} parent=1 // pred_check_branch
      %54 = sbr.rel (0) target = $region29
    $region28: #{tpu_custom_call.1} parent=1 // pred_region
      _
    $region29: #{tpu_custom_call.1} parent=1 // pred_fallthru
      _
    // Predicated region
    $region30: #{tpu_custom_call.1} parent=1 // pred_check
      _
    $region31: #{tpu_custom_call.1} parent=1 // pred_check_branch
      %56 = sbr.rel (0) target = $region33
    $region32: #{tpu_custom_call.1} parent=1 // pred_region
      %58 = vsyncadd [#allocation6], 0
      %s59 = sshll.u32 %s7, 4
      %s60 = int_to_ptr.hbm [resolvable:$true] %s59
      %s61 = sshll.u32 [#allocation5], 4
      %s62 = int_to_ptr.vmem [resolvable:$true] %s61
      %67 = dma.hbm_to_vmem [thread:$0]  %s60, 1024, %s62, [#allocation6], 64, 64, 4
    $region33: #{tpu_custom_call.1} parent=1 // pred_fallthru
      _
    // Predicated region
    $region34: #{tpu_custom_call.1} parent=1 // pred_check
      _
    $region35: #{tpu_custom_call.1} parent=1 // pred_check_branch
      %69 = sbr.rel (0) target = $region37
    $region36: #{tpu_custom_call.1} parent=1 // pred_region
      _
    $region37: #{tpu_custom_call.1} parent=1 // pred_fallthru
      _
    // Predicated region
    $region38: #{tpu_custom_call.1} parent=1 // pred_check
      _
    $region39: #{tpu_custom_call.1} parent=1 // pred_check_branch
      %71 = sbr.rel (0) target = $region41
    $region40: #{tpu_custom_call.1} parent=1 // pred_region
      _
    $region41: #{tpu_custom_call.1} parent=1 // pred_fallthru
      _
    // Predicated region
    $region42: #{tpu_custom_call.1} parent=1 // pred_check
      _
    $region43: #{tpu_custom_call.1} parent=1 // pred_check_branch
      %73 = sbr.rel (0) target = $region45
    $region44: #{tpu_custom_call.1} parent=1 // pred_region
      _
    $region45: #{tpu_custom_call.1} parent=1 // pred_fallthru
      _
    // Predicated region
    $region46: #{tpu_custom_call.1} parent=1 // pred_check
      _
    $region47: #{tpu_custom_call.1} parent=1 // pred_check_branch
      %75 = sbr.rel (0) target = $region49
    $region48: #{tpu_custom_call.1} parent=1 // pred_region
      _
    $region49: #{tpu_custom_call.1} parent=1 // pred_fallthru
      _
    // Predicated region
    $region50: #{tpu_custom_call.1} parent=1 // pred_check
      _
    $region51: #{tpu_custom_call.1} parent=1 // pred_check_branch
      %77 = sbr.rel (0) target = $region53
    $region52: #{tpu_custom_call.1} parent=1 // pred_region
      %79 = vsyncadd [#allocation6], 0
      %s80 = sshll.u32 %s12, 4
      %s81 = int_to_ptr.hbm [resolvable:$true] %s80
      %s82 = sshll.u32 [#allocation7], 4
      %s83 = int_to_ptr.vmem [resolvable:$true] %s82
      %88 = dma.hbm_to_vmem [thread:$0]  %s81, 1024, %s83, [#allocation6], 64, 64, 4
    $region53: #{tpu_custom_call.1} parent=1 // pred_fallthru
      _
    // Predicated region
    $region54: #{tpu_custom_call.1} parent=1 // pred_check
      _
    $region55: #{tpu_custom_call.1} parent=1 // pred_check_branch
      %90 = sbr.rel (0) target = $region57
    $region56: #{tpu_custom_call.1} parent=1 // pred_region
      _
    $region57: #{tpu_custom_call.1} parent=1 // pred_fallthru
      _
    // Predicated region
    $region58: #{tpu_custom_call.1} parent=1 // pred_check
      _
    $region59: #{tpu_custom_call.1} parent=1 // pred_check_branch
      %92 = sbr.rel (0) target = $region61
    $region60: #{tpu_custom_call.1} parent=1 // pred_region
      _
    $region61: #{tpu_custom_call.1} parent=1 // pred_fallthru
      _
    // Predicated region
    $region62: #{tpu_custom_call.1} parent=1 // pred_check
      _
    $region63: #{tpu_custom_call.1} parent=1 // pred_check_branch
      %94 = sbr.rel (0) target = $region65
    $region64: #{tpu_custom_call.1} parent=1 // pred_region
      _
    $region65: #{tpu_custom_call.1} parent=1 // pred_fallthru
      _
    // Predicated region
    $region66: #{tpu_custom_call.1} parent=1 // pred_check
      _
    $region67: #{tpu_custom_call.1} parent=1 // pred_check_branch
      %96 = sbr.rel (0) target = $region69
    $region68: #{tpu_custom_call.1} parent=1 // pred_region
      _
    $region69: #{tpu_custom_call.1} parent=1 // pred_fallthru
      _
    // Predicated region
    $region70: #{tpu_custom_call.1} parent=1 // pred_check
      _
    $region71: #{tpu_custom_call.1} parent=1 // pred_check_branch
      %98 = sbr.rel (0) target = $region73
    $region72: #{tpu_custom_call.1} parent=1 // pred_region
      %100 = vsyncadd [#allocation9], 0
      %s101 = sshll.u32 %s17, 4
      %s102 = int_to_ptr.hbm [resolvable:$true] %s101
      %s103 = sshll.u32 [#allocation8], 4
      %s104 = int_to_ptr.vmem [resolvable:$true] %s103
      %109 = dma.hbm_to_vmem [thread:$0]  %s102, 1024, %s104, [#allocation9], 64, 64, 4
    $region73: #{tpu_custom_call.1} parent=1 // pred_fallthru
      _
    // Predicated region
    $region74: #{tpu_custom_call.1} parent=1 // pred_check
      _
    $region75: #{tpu_custom_call.1} parent=1 // pred_check_branch
      %111 = sbr.rel (0) target = $region77
    $region76: #{tpu_custom_call.1} parent=1 // pred_region
      _
    $region77: #{tpu_custom_call.1} parent=1 // pred_fallthru
      _
    // Predicated region
    $region78: #{tpu_custom_call.1} parent=1 // pred_check
      _
    $region79: #{tpu_custom_call.1} parent=1 // pred_check_branch
      %113 = sbr.rel (0) target = $region81
    $region80: #{tpu_custom_call.1} parent=1 // pred_region
      %115 = vsyncadd [#allocation9], 0
      %s116 = sshll.u32 %s19, 4
      %s117 = int_to_ptr.hbm [resolvable:$true] %s116
      %s118 = sshll.u32 [#allocation10], 4
      %s119 = int_to_ptr.vmem [resolvable:$true] %s118
      %124 = dma.hbm_to_vmem [thread:$0]  %s117, 1024, %s119, [#allocation9], 64, 64, 4
    $region81: #{tpu_custom_call.1} parent=1 // pred_fallthru
      _
    // Predicated region
    $region82: #{tpu_custom_call.1} parent=1 // pred_check
      _
    $region83: #{tpu_custom_call.1} parent=1 // pred_check_branch
      %126 = sbr.rel (0) target = $region85
    $region84: #{tpu_custom_call.1} parent=1 // pred_region
      _
    $region85: #{tpu_custom_call.1} parent=1 // pred_fallthru
      _
    // Predicated region
    $region86: #{tpu_custom_call.1} parent=1 // pred_check
      _
    $region87: #{tpu_custom_call.1} parent=1 // pred_check_branch
      %128 = sbr.rel (0) target = $region89
    $region88: #{tpu_custom_call.1} parent=1 // pred_region
      %130 = dma.done [#allocation3], 1024
    $region89: #{tpu_custom_call.1} parent=1 // pred_fallthru
      _
    // Predicated region
    $region90: #{tpu_custom_call.1} parent=1 // pred_check
      _
    $region91: #{tpu_custom_call.1} parent=1 // pred_check_branch
      %132 = sbr.rel (0) target = $region93
    $region92: #{tpu_custom_call.1} parent=1 // pred_region
      %134 = dma.done [#allocation6], 1024
    $region93: #{tpu_custom_call.1} parent=1 // pred_fallthru
      _
    // Predicated region
    $region94: #{tpu_custom_call.1} parent=1 // pred_check
      _
    $region95: #{tpu_custom_call.1} parent=1 // pred_check_branch
      %136 = sbr.rel (0) target = $region97
    $region96: #{tpu_custom_call.1} parent=1 // pred_region
      %138 = dma.done [#allocation6], 1024
    $region97: #{tpu_custom_call.1} parent=1 // pred_fallthru
      _
    // Predicated region
    $region98: #{tpu_custom_call.1} parent=1 // pred_check
      _
    $region99: #{tpu_custom_call.1} parent=1 // pred_check_branch
      %140 = sbr.rel (0) target = $region101
    $region100: #{tpu_custom_call.1} parent=1 // pred_region
      %142 = dma.done [#allocation9], 1024
    $region101: #{tpu_custom_call.1} parent=1 // pred_fallthru
      _
    // Predicated region
    $region102: #{tpu_custom_call.1} parent=1 // pred_check
      _
    $region103: #{tpu_custom_call.1} parent=1 // pred_check_branch
      %144 = sbr.rel (0) target = $region105
    $region104: #{tpu_custom_call.1} parent=1 // pred_region
      %146 = dma.done [#allocation9], 1024
    $region105: #{tpu_custom_call.1} parent=1 // pred_fallthru
      _
    %v148 = vld [vmem:[%s0] sm:$0xf]
    %v149 = vld [vmem:[%s0 + $0x4] sm:$0xf]
    %v150 = vld [vmem:[%s14] sm:$0xff]
    %v151 = vld [vmem:[%s14 + $0x8] sm:$0xff]
    %v152 = vld [vmem:[%s15] sm:$0xff]
    %v153 = vld [vmem:[%s16] sm:$0xff]
    %v154 = vld [vmem:[%s1] sm:$0xf]
    %v155 = vld [vmem:[%s1 + $0x4] sm:$0xf]
    %v156 = vld [vmem:[#allocation2] sm:$0xf]
    %v157 = vld [vmem:[#allocation2 + $0x4] sm:$0xf]
    %v158 = vld [vmem:[#allocation2 + $0x8] sm:$0xf]
    %v159 = vld [vmem:[#allocation2 + $0xc] sm:$0xf]
    %v160 = vld [vmem:[#allocation2 + $0x10] sm:$0xf]
    %v161 = vld [vmem:[#allocation2 + $0x14] sm:$0xf]
    %v162 = vld [vmem:[#allocation2 + $0x18] sm:$0xf]
    %v163 = vld [vmem:[#allocation2 + $0x1c] sm:$0xf]
    %v164 = vld [vmem:[#allocation2 + $0x20] sm:$0xf]
    %v165 = vld [vmem:[#allocation2 + $0x24] sm:$0xf]
    %v166 = vld [vmem:[#allocation2 + $0x28] sm:$0xf]
    %v167 = vld [vmem:[#allocation2 + $0x2c] sm:$0xf]
    %v168 = vld [vmem:[#allocation2 + $0x30] sm:$0xf]
    %v169 = vld [vmem:[#allocation2 + $0x34] sm:$0xf]
    %v170 = vld [vmem:[#allocation2 + $0x38] sm:$0xf]
    %v171 = vld [vmem:[#allocation2 + $0x3c] sm:$0xf]
    %v174 = vunpack.c.l.b16 %v154
    %v175 = vunpack.c.l.b16 %v155
    %v176 = vpack.c.b16 %v175, %v174
    %v194 = vunpack.c.l.b16 %v156
    %v195 = vunpack.c.l.b16 %v157
    %v196 = vunpack.c.l.b16 %v158
    %v197 = vunpack.c.l.b16 %v159
    %v198 = vunpack.c.l.b16 %v160
    %v199 = vunpack.c.l.b16 %v161
    %v200 = vunpack.c.l.b16 %v162
    %v201 = vunpack.c.l.b16 %v163
    %v202 = vunpack.c.l.b16 %v164
    %v203 = vunpack.c.l.b16 %v165
    %v204 = vunpack.c.l.b16 %v166
    %v205 = vunpack.c.l.b16 %v167
    %v206 = vunpack.c.l.b16 %v168
    %v207 = vunpack.c.l.b16 %v169
    %v208 = vunpack.c.l.b16 %v170
    %v209 = vunpack.c.l.b16 %v171
    %v210 = vpack.c.b16 %v195, %v194
    %v211 = vpack.c.b16 %v197, %v196
    %v212 = vpack.c.b16 %v199, %v198
    %v213 = vpack.c.b16 %v201, %v200
    %v214 = vpack.c.b16 %v203, %v202
    %v215 = vpack.c.b16 %v205, %v204
    %v216 = vpack.c.b16 %v207, %v206
    %v217 = vpack.c.b16 %v209, %v208
    %226 = vmatpush.bf16.msra.mxu0 %v217
    %227 = vmatpush.bf16.msra.mxu0 %v216
    %228 = vmatpush.bf16.msra.mxu0 %v215
    %229 = vmatpush.bf16.msra.mxu0 %v214
    %230 = vmatpush.bf16.msra.mxu0 %v213
    %231 = vmatpush.bf16.msra.mxu0 %v212
    %232 = vmatpush.bf16.msra.mxu0 %v211
    %233 = vmatpush.bf16.msra.mxu0 %v210
    %234 = vmatmul.bf16.gmra.mxu0 %v176
    %v235 = vpop.f32.mrf.mxu0
    %v236 = vadd.f32 0.0, %v235
    %v237 = vpop.f32.mrf.mxu0
    %v238 = vadd.f32 0.0, %v237
    %239 = vdwg.mxu0
    %v240 = vpack.c.bf16 %v238, %v236
    %v241 = vld [vmem:[%s3] sm:$0x1]
    %v243 = vperm.slane %v241, 0
    %v247 = vunpack.c.l.b16 %v148
    %v248 = vunpack.c.l.b16 %v149
    %v249 = vpack.c.b16 %v248, %v247
    %vm250 = vcmask 130048
    %v252 = vsel %vm250, %v249, 0
    %254 = vmatpush.bf16.msra.mxu0 0
    %255 = vmatpush.bf16.msra.mxu0 0
    %256 = vmatpush.bf16.msra.mxu0 0
    %257 = vmatpush.bf16.msra.mxu0 0
    %258 = vmatpush.bf16.msra.mxu0 0
    %259 = vmatpush.bf16.msra.mxu0 0
    %260 = vmatpush.bf16.msra.mxu0 0
    %261 = vmatpush.bf16.msra.mxu0 %v240
    %262 = vmatmul.bf16.gmra.mxu0 %v252
    %v263 = vpop.f32.mrf.mxu0
    %v264 = vadd.f32 %v243, %v263
    %v265 = vpop.f32.mrf.mxu0
    %v266 = vadd.f32 %v243, %v265
    %267 = vdwg.mxu0
    %v268 = vld [vmem:[%s4] sm:$0x1]
    %v269 = vld [vmem:[%s5] sm:$0x1]
    %v270 = vld [vmem:[%s6] sm:$0x1]
    %v272 = vsel %vm250, %v152, 0
    %274 = vmatpush.msra.mxu0 0.0
    %275 = vmatpush.msra.mxu0 0.0
    %276 = vmatpush.msra.mxu0 0.0
    %277 = vmatpush.msra.mxu0 0.0
    %278 = vmatpush.msra.mxu0 0.0
    %279 = vmatpush.msra.mxu0 0.0
    %280 = vmatpush.msra.mxu0 0.0
    %281 = vmatpush.msra.mxu0 0.0
    %282 = vmatpush.msra.mxu0 0.0
    %283 = vmatpush.msra.mxu0 0.0
    %284 = vmatpush.msra.mxu0 0.0
    %285 = vmatpush.msra.mxu0 0.0
    %286 = vmatpush.msra.mxu0 0.0
    %287 = vmatpush.msra.mxu0 0.0
    %288 = vmatpush.msra.mxu0 %v266
    %289 = vmatpush.msra.mxu0 %v264
    %290 = vmatmul.f32.gmra.mxu0 %v272
    %v291 = vpop.f32.mrf.mxu0
    %v292 = vadd.f32 0.0, %v291
    %293 = vdwg.mxu0
    %295 = vset.pattern.permute.xlu0 0
    %296 = vperm.xlu0 %295, %v153
    %v297 = vpop.permute.xlu0 %296
    %v299 = vmul.f32 %v292, %v297
    %vm300 = vcmask 64512
    %v302 = vsel %vm300, %v150, 0
    %v305 = vsel %vm300, %v151, 0
    %307 = vmatpush.msra.mxu0 0.0
    %308 = vmatpush.msra.mxu0 0.0
    %309 = vmatpush.msra.mxu0 0.0
    %310 = vmatpush.msra.mxu0 0.0
    %311 = vmatpush.msra.mxu0 0.0
    %312 = vmatpush.msra.mxu0 0.0
    %313 = vmatpush.msra.mxu0 0.0
    %314 = vmatpush.msra.mxu0 0.0
    %315 = vmatpush.msra.mxu0 0.0
    %316 = vmatpush.msra.mxu0 0.0
    %317 = vmatpush.msra.mxu0 0.0
    %318 = vmatpush.msra.mxu0 0.0
    %319 = vmatpush.msra.mxu0 0.0
    %320 = vmatpush.msra.mxu0 0.0
    %321 = vmatpush.msra.mxu0 0.0
    %322 = vmatpush.msra.mxu0 %v299
    %323 = vmatmul.f32.gmra.mxu0 %v302
    %v324 = vpop.f32.mrf.mxu0
    %v325 = vadd.f32 0.0, %v324
    %326 = vmatmul.f32.gmra.mxu0 %v305
    %v327 = vpop.f32.mrf.mxu0
    %v328 = vadd.f32 0.0, %v327
    %329 = vdwg.mxu0
    %v331 = vperm.slane %v268, 0
    %v333 = vmul.f32 %v331, %v325
    %v334 = vmul.f32 %v331, %v328
    %v335 = vsub.f32 %v264, %v333
    %v336 = vsub.f32 %v266, %v334
    %v337 = vmul.f32 %v335, %v335
    %v338 = vmul.f32 %v336, %v336
    %339 = vmatpush.msra.mxu0 0.0
    %340 = vmatpush.msra.mxu0 0.0
    %341 = vmatpush.msra.mxu0 0.0
    %342 = vmatpush.msra.mxu0 0.0
    %343 = vmatpush.msra.mxu0 0.0
    %344 = vmatpush.msra.mxu0 0.0
    %345 = vmatpush.msra.mxu0 0.0
    %346 = vmatpush.msra.mxu0 0.0
    %347 = vmatpush.msra.mxu0 0.0
    %348 = vmatpush.msra.mxu0 0.0
    %349 = vmatpush.msra.mxu0 0.0
    %350 = vmatpush.msra.mxu0 0.0
    %351 = vmatpush.msra.mxu0 0.0
    %352 = vmatpush.msra.mxu0 0.0
    %353 = vmatpush.msra.mxu0 %v338
    %354 = vmatpush.msra.mxu0 %v337
    %355 = vmatmul.f32.gmra.mxu0 %v272
    %v356 = vpop.f32.mrf.mxu0
    %v357 = vadd.f32 0.0, %v356
    %358 = vdwg.mxu0
    %v359 = vmul.f32 %v357, %v297
    %v361 = vperm.slane %v269, 0
    %v363 = vmul.f32 %v361, %v335
    %v364 = vmul.f32 %v361, %v336
    %365 = vmatpush.msra.mxu0 0.0
    %366 = vmatpush.msra.mxu0 0.0
    %367 = vmatpush.msra.mxu0 0.0
    %368 = vmatpush.msra.mxu0 0.0
    %369 = vmatpush.msra.mxu0 0.0
    %370 = vmatpush.msra.mxu0 0.0
    %371 = vmatpush.msra.mxu0 0.0
    %372 = vmatpush.msra.mxu0 0.0
    %373 = vmatpush.msra.mxu0 0.0
    %374 = vmatpush.msra.mxu0 0.0
    %375 = vmatpush.msra.mxu0 0.0
    %376 = vmatpush.msra.mxu0 0.0
    %377 = vmatpush.msra.mxu0 0.0
    %378 = vmatpush.msra.mxu0 0.0
    %379 = vmatpush.msra.mxu0 0.0
    %380 = vmatpush.msra.mxu0 %v359
    %381 = vmatmul.f32.gmra.mxu0 %v302
    %v382 = vpop.f32.mrf.mxu0
    %v383 = vadd.f32 1e-05, %v382
    %384 = vmatmul.f32.gmra.mxu0 %v305
    %v385 = vpop.f32.mrf.mxu0
    %v386 = vadd.f32 1e-05, %v385
    %387 = vdwg.mxu0
    %v388 = vrsqrt.pop %v383
    %v389 = vmul.f32 %v388, %v383
    %v390 = vmul.f32 %v389, %v388
    %v391 = vmul.f32 0.5, %v390
    %v392 = vsub.f32 1.5, %v391
    %v393 = vmul.f32 %v388, %v392
    %vm394 = vweird.f32 %v383
    %vm395 = vweird.f32 %v388
    %vm396 = vmor %vm394, %vm395
    %v397 = vsel %vm396, %v388, %v393
    %v398 = vrsqrt.pop %v386
    %v399 = vmul.f32 %v398, %v386
    %v400 = vmul.f32 %v399, %v398
    %v401 = vmul.f32 0.5, %v400
    %v402 = vsub.f32 1.5, %v401
    %v403 = vmul.f32 %v398, %v402
    %vm404 = vweird.f32 %v386
    %vm405 = vweird.f32 %v398
    %vm406 = vmor %vm404, %vm405
    %v407 = vsel %vm406, %v398, %v403
    %v408 = vmul.f32 %v363, %v397
    %v409 = vmul.f32 %v364, %v407
    %v411 = vperm.slane %v270, 0
    %v413 = vadd.f32 %v408, %v411
    %v414 = vadd.f32 %v409, %v411
    %v415 = vmax.f32 %v413, 0.0
    %v416 = vmax.f32 %v414, 0.0
    %v417 = vpack.c.bf16 %v416, %v415
    %v418 = vld [vmem:[#allocation5] sm:$0xf]
    %v419 = vld [vmem:[#allocation5 + $0x4] sm:$0xf]
    %v420 = vld [vmem:[#allocation5 + $0x8] sm:$0xf]
    %v421 = vld [vmem:[#allocation5 + $0xc] sm:$0xf]
    %v422 = vld [vmem:[#allocation5 + $0x10] sm:$0xf]
    %v423 = vld [vmem:[#allocation5 + $0x14] sm:$0xf]
    %v424 = vld [vmem:[#allocation5 + $0x18] sm:$0xf]
    %v425 = vld [vmem:[#allocation5 + $0x1c] sm:$0xf]
    %v426 = vld [vmem:[#allocation5 + $0x20] sm:$0xf]
    %v427 = vld [vmem:[#allocation5 + $0x24] sm:$0xf]
    %v428 = vld [vmem:[#allocation5 + $0x28] sm:$0xf]
    %v429 = vld [vmem:[#allocation5 + $0x2c] sm:$0xf]
    %v430 = vld [vmem:[#allocation5 + $0x30] sm:$0xf]
    %v431 = vld [vmem:[#allocation5 + $0x34] sm:$0xf]
    %v432 = vld [vmem:[#allocation5 + $0x38] sm:$0xf]
    %v433 = vld [vmem:[#allocation5 + $0x3c] sm:$0xf]
    %v450 = vunpack.c.l.b16 %v418
    %v451 = vunpack.c.l.b16 %v419
    %v452 = vunpack.c.l.b16 %v420
    %v453 = vunpack.c.l.b16 %v421
    %v454 = vunpack.c.l.b16 %v422
    %v455 = vunpack.c.l.b16 %v423
    %v456 = vunpack.c.l.b16 %v424
    %v457 = vunpack.c.l.b16 %v425
    %v458 = vunpack.c.l.b16 %v426
    %v459 = vunpack.c.l.b16 %v427
    %v460 = vunpack.c.l.b16 %v428
    %v461 = vunpack.c.l.b16 %v429
    %v462 = vunpack.c.l.b16 %v430
    %v463 = vunpack.c.l.b16 %v431
    %v464 = vunpack.c.l.b16 %v432
    %v465 = vunpack.c.l.b16 %v433
    %v466 = vpack.c.b16 %v451, %v450
    %v467 = vpack.c.b16 %v453, %v452
    %v468 = vpack.c.b16 %v455, %v454
    %v469 = vpack.c.b16 %v457, %v456
    %v470 = vpack.c.b16 %v459, %v458
    %v471 = vpack.c.b16 %v461, %v460
    %v472 = vpack.c.b16 %v463, %v462
    %v473 = vpack.c.b16 %v465, %v464
    %482 = vmatpush.bf16.msra.mxu0 %v473
    %483 = vmatpush.bf16.msra.mxu0 %v472
    %484 = vmatpush.bf16.msra.mxu0 %v471
    %485 = vmatpush.bf16.msra.mxu0 %v470
    %486 = vmatpush.bf16.msra.mxu0 %v469
    %487 = vmatpush.bf16.msra.mxu0 %v468
    %488 = vmatpush.bf16.msra.mxu0 %v467
    %489 = vmatpush.bf16.msra.mxu0 %v466
    %490 = vmatmul.bf16.gmra.mxu0 %v417
    %v491 = vpop.f32.mrf.mxu0
    %v492 = vadd.f32 0.0, %v491
    %v493 = vpop.f32.mrf.mxu0
    %v494 = vadd.f32 0.0, %v493
    %495 = vdwg.mxu0
    %v496 = vpack.c.bf16 %v494, %v492
    %v497 = vld [vmem:[%s8] sm:$0x1]
    %v499 = vperm.slane %v497, 0
    %501 = vmatpush.bf16.msra.mxu0 0
    %502 = vmatpush.bf16.msra.mxu0 0
    %503 = vmatpush.bf16.msra.mxu0 0
    %504 = vmatpush.bf16.msra.mxu0 0
    %505 = vmatpush.bf16.msra.mxu0 0
    %506 = vmatpush.bf16.msra.mxu0 0
    %507 = vmatpush.bf16.msra.mxu0 0
    %508 = vmatpush.bf16.msra.mxu0 %v496
    %509 = vmatmul.bf16.gmra.mxu0 %v252
    %v510 = vpop.f32.mrf.mxu0
    %v511 = vadd.f32 %v499, %v510
    %v512 = vpop.f32.mrf.mxu0
    %v513 = vadd.f32 %v499, %v512
    %514 = vdwg.mxu0
    %v515 = vld [vmem:[%s9] sm:$0x1]
    %v516 = vld [vmem:[%s10] sm:$0x1]
    %v517 = vld [vmem:[%s11] sm:$0x1]
    %518 = vmatpush.msra.mxu0 0.0
    %519 = vmatpush.msra.mxu0 0.0
    %520 = vmatpush.msra.mxu0 0.0
    %521 = vmatpush.msra.mxu0 0.0
    %522 = vmatpush.msra.mxu0 0.0
    %523 = vmatpush.msra.mxu0 0.0
    %524 = vmatpush.msra.mxu0 0.0
    %525 = vmatpush.msra.mxu0 0.0
    %526 = vmatpush.msra.mxu0 0.0
    %527 = vmatpush.msra.mxu0 0.0
    %528 = vmatpush.msra.mxu0 0.0
    %529 = vmatpush.msra.mxu0 0.0
    %530 = vmatpush.msra.mxu0 0.0
    %531 = vmatpush.msra.mxu0 0.0
    %532 = vmatpush.msra.mxu0 %v513
    %533 = vmatpush.msra.mxu0 %v511
    %534 = vmatmul.f32.gmra.mxu0 %v272
    %v535 = vpop.f32.mrf.mxu0
    %v536 = vadd.f32 0.0, %v535
    %537 = vdwg.mxu0
    %v538 = vmul.f32 %v536, %v297
    %539 = vmatpush.msra.mxu0 0.0
    %540 = vmatpush.msra.mxu0 0.0
    %541 = vmatpush.msra.mxu0 0.0
    %542 = vmatpush.msra.mxu0 0.0
    %543 = vmatpush.msra.mxu0 0.0
    %544 = vmatpush.msra.mxu0 0.0
    %545 = vmatpush.msra.mxu0 0.0
    %546 = vmatpush.msra.mxu0 0.0
    %547 = vmatpush.msra.mxu0 0.0
    %548 = vmatpush.msra.mxu0 0.0
    %549 = vmatpush.msra.mxu0 0.0
    %550 = vmatpush.msra.mxu0 0.0
    %551 = vmatpush.msra.mxu0 0.0
    %552 = vmatpush.msra.mxu0 0.0
    %553 = vmatpush.msra.mxu0 0.0
    %554 = vmatpush.msra.mxu0 %v538
    %555 = vmatmul.f32.gmra.mxu0 %v302
    %v556 = vpop.f32.mrf.mxu0
    %v557 = vadd.f32 0.0, %v556
    %558 = vmatmul.f32.gmra.mxu0 %v305
    %v559 = vpop.f32.mrf.mxu0
    %v560 = vadd.f32 0.0, %v559
    %561 = vdwg.mxu0
    %v563 = vperm.slane %v515, 0
    %v565 = vmul.f32 %v563, %v557
    %v566 = vmul.f32 %v563, %v560
    %v567 = vsub.f32 %v511, %v565
    %v568 = vsub.f32 %v513, %v566
    %v569 = vmul.f32 %v567, %v567
    %v570 = vmul.f32 %v568, %v568
    %571 = vmatpush.msra.mxu0 0.0
    %572 = vmatpush.msra.mxu0 0.0
    %573 = vmatpush.msra.mxu0 0.0
    %574 = vmatpush.msra.mxu0 0.0
    %575 = vmatpush.msra.mxu0 0.0
    %576 = vmatpush.msra.mxu0 0.0
    %577 = vmatpush.msra.mxu0 0.0
    %578 = vmatpush.msra.mxu0 0.0
    %579 = vmatpush.msra.mxu0 0.0
    %580 = vmatpush.msra.mxu0 0.0
    %581 = vmatpush.msra.mxu0 0.0
    %582 = vmatpush.msra.mxu0 0.0
    %583 = vmatpush.msra.mxu0 0.0
    %584 = vmatpush.msra.mxu0 0.0
    %585 = vmatpush.msra.mxu0 %v570
    %586 = vmatpush.msra.mxu0 %v569
    %587 = vmatmul.f32.gmra.mxu0 %v272
    %v588 = vpop.f32.mrf.mxu0
    %v589 = vadd.f32 0.0, %v588
    %590 = vdwg.mxu0
    %v591 = vmul.f32 %v589, %v297
    %v593 = vperm.slane %v516, 0
    %v595 = vmul.f32 %v593, %v567
    %v596 = vmul.f32 %v593, %v568
    %597 = vmatpush.msra.mxu0 0.0
    %598 = vmatpush.msra.mxu0 0.0
    %599 = vmatpush.msra.mxu0 0.0
    %600 = vmatpush.msra.mxu0 0.0
    %601 = vmatpush.msra.mxu0 0.0
    %602 = vmatpush.msra.mxu0 0.0
    %603 = vmatpush.msra.mxu0 0.0
    %604 = vmatpush.msra.mxu0 0.0
    %605 = vmatpush.msra.mxu0 0.0
    %606 = vmatpush.msra.mxu0 0.0
    %607 = vmatpush.msra.mxu0 0.0
    %608 = vmatpush.msra.mxu0 0.0
    %609 = vmatpush.msra.mxu0 0.0
    %610 = vmatpush.msra.mxu0 0.0
    %611 = vmatpush.msra.mxu0 0.0
    %612 = vmatpush.msra.mxu0 %v591
    %613 = vmatmul.f32.gmra.mxu0 %v302
    %v614 = vpop.f32.mrf.mxu0
    %v615 = vadd.f32 1e-05, %v614
    %616 = vmatmul.f32.gmra.mxu0 %v305
    %v617 = vpop.f32.mrf.mxu0
    %v618 = vadd.f32 1e-05, %v617
    %619 = vdwg.mxu0
    %v620 = vrsqrt.pop %v615
    %v621 = vmul.f32 %v620, %v615
    %v622 = vmul.f32 %v621, %v620
    %v623 = vmul.f32 0.5, %v622
    %v624 = vsub.f32 1.5, %v623
    %v625 = vmul.f32 %v620, %v624
    %vm626 = vweird.f32 %v615
    %vm627 = vweird.f32 %v620
    %vm628 = vmor %vm626, %vm627
    %v629 = vsel %vm628, %v620, %v625
    %v630 = vrsqrt.pop %v618
    %v631 = vmul.f32 %v630, %v618
    %v632 = vmul.f32 %v631, %v630
    %v633 = vmul.f32 0.5, %v632
    %v634 = vsub.f32 1.5, %v633
    %v635 = vmul.f32 %v630, %v634
    %vm636 = vweird.f32 %v618
    %vm637 = vweird.f32 %v630
    %vm638 = vmor %vm636, %vm637
    %v639 = vsel %vm638, %v630, %v635
    %v640 = vmul.f32 %v595, %v629
    %v641 = vmul.f32 %v596, %v639
    %v643 = vperm.slane %v517, 0
    %v645 = vadd.f32 %v640, %v643
    %v646 = vadd.f32 %v641, %v643
    %v647 = vmax.f32 %v645, 0.0
    %v648 = vmax.f32 %v646, 0.0
    %v649 = vpack.c.bf16 %v648, %v647
    %v650 = vld [vmem:[#allocation7] sm:$0xf]
    %v651 = vld [vmem:[#allocation7 + $0x4] sm:$0xf]
    %v652 = vld [vmem:[#allocation7 + $0x8] sm:$0xf]
    %v653 = vld [vmem:[#allocation7 + $0xc] sm:$0xf]
    %v654 = vld [vmem:[#allocation7 + $0x10] sm:$0xf]
    %v655 = vld [vmem:[#allocation7 + $0x14] sm:$0xf]
    %v656 = vld [vmem:[#allocation7 + $0x18] sm:$0xf]
    %v657 = vld [vmem:[#allocation7 + $0x1c] sm:$0xf]
    %v658 = vld [vmem:[#allocation7 + $0x20] sm:$0xf]
    %v659 = vld [vmem:[#allocation7 + $0x24] sm:$0xf]
    %v660 = vld [vmem:[#allocation7 + $0x28] sm:$0xf]
    %v661 = vld [vmem:[#allocation7 + $0x2c] sm:$0xf]
    %v662 = vld [vmem:[#allocation7 + $0x30] sm:$0xf]
    %v663 = vld [vmem:[#allocation7 + $0x34] sm:$0xf]
    %v664 = vld [vmem:[#allocation7 + $0x38] sm:$0xf]
    %v665 = vld [vmem:[#allocation7 + $0x3c] sm:$0xf]
    %v682 = vunpack.c.l.b16 %v650
    %v683 = vunpack.c.l.b16 %v651
    %v684 = vunpack.c.l.b16 %v652
    %v685 = vunpack.c.l.b16 %v653
    %v686 = vunpack.c.l.b16 %v654
    %v687 = vunpack.c.l.b16 %v655
    %v688 = vunpack.c.l.b16 %v656
    %v689 = vunpack.c.l.b16 %v657
    %v690 = vunpack.c.l.b16 %v658
    %v691 = vunpack.c.l.b16 %v659
    %v692 = vunpack.c.l.b16 %v660
    %v693 = vunpack.c.l.b16 %v661
    %v694 = vunpack.c.l.b16 %v662
    %v695 = vunpack.c.l.b16 %v663
    %v696 = vunpack.c.l.b16 %v664
    %v697 = vunpack.c.l.b16 %v665
    %v698 = vpack.c.b16 %v683, %v682
    %v699 = vpack.c.b16 %v685, %v684
    %v700 = vpack.c.b16 %v687, %v686
    %v701 = vpack.c.b16 %v689, %v688
    %v702 = vpack.c.b16 %v691, %v690
    %v703 = vpack.c.b16 %v693, %v692
    %v704 = vpack.c.b16 %v695, %v694
    %v705 = vpack.c.b16 %v697, %v696
    %714 = vmatpush.bf16.msra.mxu0 %v705
    %715 = vmatpush.bf16.msra.mxu0 %v704
    %716 = vmatpush.bf16.msra.mxu0 %v703
    %717 = vmatpush.bf16.msra.mxu0 %v702
    %718 = vmatpush.bf16.msra.mxu0 %v701
    %719 = vmatpush.bf16.msra.mxu0 %v700
    %720 = vmatpush.bf16.msra.mxu0 %v699
    %721 = vmatpush.bf16.msra.mxu0 %v698
    %722 = vmatmul.bf16.gmra.mxu0 %v649
    %v723 = vpop.f32.mrf.mxu0
    %v724 = vadd.f32 0.0, %v723
    %v725 = vpop.f32.mrf.mxu0
    %v726 = vadd.f32 0.0, %v725
    %727 = vdwg.mxu0
    %v728 = vpack.c.bf16 %v726, %v724
    %v729 = vld [vmem:[%s13] sm:$0x1]
    %v731 = vperm.slane %v729, 0
    %733 = vmatpush.bf16.msra.mxu0 0
    %734 = vmatpush.bf16.msra.mxu0 0
    %735 = vmatpush.bf16.msra.mxu0 0
    %736 = vmatpush.bf16.msra.mxu0 0
    %737 = vmatpush.bf16.msra.mxu0 0
    %738 = vmatpush.bf16.msra.mxu0 0
    %739 = vmatpush.bf16.msra.mxu0 0
    %740 = vmatpush.bf16.msra.mxu0 %v728
    %741 = vmatmul.bf16.gmra.mxu0 %v252
    %v742 = vpop.f32.mrf.mxu0
    %v743 = vadd.f32 %v731, %v742
    %v744 = vpop.f32.mrf.mxu0
    %v745 = vadd.f32 %v731, %v744
    %746 = vdwg.mxu0
    %747 = vmatpush.msra.mxu0 0.0
    %748 = vmatpush.msra.mxu0 0.0
    %749 = vmatpush.msra.mxu0 0.0
    %750 = vmatpush.msra.mxu0 0.0
    %751 = vmatpush.msra.mxu0 0.0
    %752 = vmatpush.msra.mxu0 0.0
    %753 = vmatpush.msra.mxu0 0.0
    %754 = vmatpush.msra.mxu0 0.0
    %755 = vmatpush.msra.mxu0 0.0
    %756 = vmatpush.msra.mxu0 0.0
    %757 = vmatpush.msra.mxu0 0.0
    %758 = vmatpush.msra.mxu0 0.0
    %759 = vmatpush.msra.mxu0 0.0
    %760 = vmatpush.msra.mxu0 0.0
    %761 = vmatpush.msra.mxu0 %v745
    %762 = vmatpush.msra.mxu0 %v743
    %763 = vmatmul.f32.gmra.mxu0 %v272
    %v764 = vpop.f32.mrf.mxu0
    %v765 = vadd.f32 0.0, %v764
    %766 = vdwg.mxu0
    %v767 = vmul.f32 %v765, %v297
    %v768 = vpack.c.bf16 %v767, %v767
    %v769 = vld [vmem:[#allocation8] sm:$0xf]
    %v770 = vld [vmem:[#allocation8 + $0x4] sm:$0xf]
    %v771 = vld [vmem:[#allocation8 + $0x8] sm:$0xf]
    %v772 = vld [vmem:[#allocation8 + $0xc] sm:$0xf]
    %v773 = vld [vmem:[#allocation8 + $0x10] sm:$0xf]
    %v774 = vld [vmem:[#allocation8 + $0x14] sm:$0xf]
    %v775 = vld [vmem:[#allocation8 + $0x18] sm:$0xf]
    %v776 = vld [vmem:[#allocation8 + $0x1c] sm:$0xf]
    %v777 = vld [vmem:[#allocation8 + $0x20] sm:$0xf]
    %v778 = vld [vmem:[#allocation8 + $0x24] sm:$0xf]
    %v779 = vld [vmem:[#allocation8 + $0x28] sm:$0xf]
    %v780 = vld [vmem:[#allocation8 + $0x2c] sm:$0xf]
    %v781 = vld [vmem:[#allocation8 + $0x30] sm:$0xf]
    %v782 = vld [vmem:[#allocation8 + $0x34] sm:$0xf]
    %v783 = vld [vmem:[#allocation8 + $0x38] sm:$0xf]
    %v784 = vld [vmem:[#allocation8 + $0x3c] sm:$0xf]
    %v785 = vld [vmem:[%s18] sm:$0x1]
    %v787 = vperm.slane %v785, 0
    %v805 = vunpack.c.l.b16 %v769
    %v806 = vunpack.c.l.b16 %v770
    %v807 = vunpack.c.l.b16 %v771
    %v808 = vunpack.c.l.b16 %v772
    %v809 = vunpack.c.l.b16 %v773
    %v810 = vunpack.c.l.b16 %v774
    %v811 = vunpack.c.l.b16 %v775
    %v812 = vunpack.c.l.b16 %v776
    %v813 = vunpack.c.l.b16 %v777
    %v814 = vunpack.c.l.b16 %v778
    %v815 = vunpack.c.l.b16 %v779
    %v816 = vunpack.c.l.b16 %v780
    %v817 = vunpack.c.l.b16 %v781
    %v818 = vunpack.c.l.b16 %v782
    %v819 = vunpack.c.l.b16 %v783
    %v820 = vunpack.c.l.b16 %v784
    %v821 = vpack.c.b16 %v806, %v805
    %v822 = vpack.c.b16 %v808, %v807
    %v823 = vpack.c.b16 %v810, %v809
    %v824 = vpack.c.b16 %v812, %v811
    %v825 = vpack.c.b16 %v814, %v813
    %v826 = vpack.c.b16 %v816, %v815
    %v827 = vpack.c.b16 %v818, %v817
    %v828 = vpack.c.b16 %v820, %v819
    %837 = vmatpush.bf16.msra.mxu0 %v828
    %838 = vmatpush.bf16.msra.mxu0 %v827
    %839 = vmatpush.bf16.msra.mxu0 %v826
    %840 = vmatpush.bf16.msra.mxu0 %v825
    %841 = vmatpush.bf16.msra.mxu0 %v824
    %842 = vmatpush.bf16.msra.mxu0 %v823
    %843 = vmatpush.bf16.msra.mxu0 %v822
    %844 = vmatpush.bf16.msra.mxu0 %v821
    %845 = vmatmul.bf16.gmra.mxu0 %v768
    %v846 = vpop.f32.mrf.mxu0
    %v847 = vadd.f32 %v787, %v846
    %v848 = vpop.f32.mrf.mxu0
    %849 = vdwg.mxu0
    %v850 = vmax.f32 %v847, 0.0
    %v851 = vpack.c.bf16 %v850, %v850
    %v852 = vld [vmem:[#allocation10] sm:$0xf]
    %v853 = vld [vmem:[#allocation10 + $0x4] sm:$0xf]
    %v854 = vld [vmem:[#allocation10 + $0x8] sm:$0xf]
    %v855 = vld [vmem:[#allocation10 + $0xc] sm:$0xf]
    %v856 = vld [vmem:[#allocation10 + $0x10] sm:$0xf]
    %v857 = vld [vmem:[#allocation10 + $0x14] sm:$0xf]
    %v858 = vld [vmem:[#allocation10 + $0x18] sm:$0xf]
    %v859 = vld [vmem:[#allocation10 + $0x1c] sm:$0xf]
    %v860 = vld [vmem:[#allocation10 + $0x20] sm:$0xf]
    %v861 = vld [vmem:[#allocation10 + $0x24] sm:$0xf]
    %v862 = vld [vmem:[#allocation10 + $0x28] sm:$0xf]
    %v863 = vld [vmem:[#allocation10 + $0x2c] sm:$0xf]
    %v864 = vld [vmem:[#allocation10 + $0x30] sm:$0xf]
    %v865 = vld [vmem:[#allocation10 + $0x34] sm:$0xf]
    %v866 = vld [vmem:[#allocation10 + $0x38] sm:$0xf]
    %v867 = vld [vmem:[#allocation10 + $0x3c] sm:$0xf]
    %v868 = vld [vmem:[%s20] sm:$0x1]
    %v870 = vperm.slane %v868, 0
    %v888 = vunpack.c.l.b16 %v852
    %v889 = vunpack.c.l.b16 %v853
    %v890 = vunpack.c.l.b16 %v854
    %v891 = vunpack.c.l.b16 %v855
    %v892 = vunpack.c.l.b16 %v856
    %v893 = vunpack.c.l.b16 %v857
    %v894 = vunpack.c.l.b16 %v858
    %v895 = vunpack.c.l.b16 %v859
    %v896 = vunpack.c.l.b16 %v860
    %v897 = vunpack.c.l.b16 %v861
    %v898 = vunpack.c.l.b16 %v862
    %v899 = vunpack.c.l.b16 %v863
    %v900 = vunpack.c.l.b16 %v864
    %v901 = vunpack.c.l.b16 %v865
    %v902 = vunpack.c.l.b16 %v866
    %v903 = vunpack.c.l.b16 %v867
    %v904 = vpack.c.b16 %v889, %v888
    %v905 = vpack.c.b16 %v891, %v890
    %v906 = vpack.c.b16 %v893, %v892
    %v907 = vpack.c.b16 %v895, %v894
    %v908 = vpack.c.b16 %v897, %v896
    %v909 = vpack.c.b16 %v899, %v898
    %v910 = vpack.c.b16 %v901, %v900
    %v911 = vpack.c.b16 %v903, %v902
    %920 = vmatpush.bf16.msra.mxu0 %v911
    %921 = vmatpush.bf16.msra.mxu0 %v910
    %922 = vmatpush.bf16.msra.mxu0 %v909
    %923 = vmatpush.bf16.msra.mxu0 %v908
    %924 = vmatpush.bf16.msra.mxu0 %v907
    %925 = vmatpush.bf16.msra.mxu0 %v906
    %926 = vmatpush.bf16.msra.mxu0 %v905
    %927 = vmatpush.bf16.msra.mxu0 %v904
    %928 = vmatmul.bf16.gmra.mxu0 %v851
    %v929 = vpop.f32.mrf.mxu0
    %v930 = vadd.f32 %v870, %v929
    %v931 = vpop.f32.mrf.mxu0
    %932 = vdwg.mxu0
    %933 = vst [vmem:[#allocation11] sm:$0xff] %v930
    // Predicated region
    $region106: #{tpu_custom_call.1} parent=1 // pred_check
      _
    $region107: #{tpu_custom_call.1} parent=1 // pred_check_branch
      %935 = sbr.rel (0) target = $region109
    $region108: #{tpu_custom_call.1} parent=1 // pred_region
      %937 = vsyncadd [#allocation4], 0
      %s939 = sshll.u32 [#allocation11], 4
      %s940 = int_to_ptr.vmem [resolvable:$true] %s939
      %s941 = sshll.u32 %s21, 4
      %s942 = int_to_ptr.hbm [resolvable:$true] %s941
      %944 = dma.vmem_to_hbm [thread:$0]  %s940, 128, %s942, [#allocation4]
    $region109: #{tpu_custom_call.1} parent=1 // pred_fallthru
      _
    // Predicated region
    $region110: #{tpu_custom_call.1} parent=1 // pred_check
      _
    $region111: #{tpu_custom_call.1} parent=1 // pred_check_branch
      %946 = sbr.rel (0) target = $region113
    $region112: #{tpu_custom_call.1} parent=1 // pred_region
      %948 = dma.done [#allocation4], 128
    $region113: #{tpu_custom_call.1} parent=1 // pred_fallthru
      _
    %949 = vsyncpa [#allocation3], 1
    %950 = vsyncpa [#allocation6], 1
    %951 = vsyncpa [#allocation9], 1
    %952 = vsyncpa [#allocation4], 1

</llo_original>
